<compile_context>
chip_gen: v5e
topology: v5e:2x2
jax: 0.10.0
libtpu: 0.0.40
codegen_flags: <defaults>
</compile_context>

<pallas_src>
import functools

import jax
import jax.numpy as jnp
from jax.experimental import pallas as pl
from jax.experimental.pallas import tpu as pltpu

INPUT_SIZE = 112
INPUT_PAD = 128          # zero-padded feature dim (lane-aligned)
HIDDEN_SIZE = 256
BN_EPS = 1e-5


def _round_up(x, m):
    return ((x + m - 1) // m) * m


def _encoder_kernel(x_ref,
                    w1_ref, b1_ref,
                    w2_ref, b2_ref,
                    w3_ref, b3_ref,
                    w4_ref, b4_ref,
                    o_ref):
    def linear(h, w_ref, b_ref):
        # bf16 operands on the MXU, f32 accumulate; bias add in f32.
        return jnp.dot(h.astype(w_ref.dtype), w_ref[...],
                       preferred_element_type=jnp.float32) + b_ref[...]

    def leaky_relu(h):
        # equivalent to LeakyReLU(0.1) for slope in (0, 1)
        return jnp.maximum(h, 0.1 * h)

    h = x_ref[...]                                   # f32 activations
    h = leaky_relu(linear(h, w1_ref, b1_ref))        # fc1 + bn1 (folded) + act
    h = leaky_relu(linear(h, w2_ref, b2_ref))        # fc2 + bn2 (folded) + act
    h = leaky_relu(linear(h, w3_ref, b3_ref))        # fc3 + bn3 (folded) + act
    h = linear(h, w4_ref, b4_ref)                    # fc4 + bn4 (folded)

    # F.normalize(h, p=2, dim=1): x / max(||x||_2, 1e-12)
    sq = jnp.sum(h * h, axis=1, keepdims=True)
    inv = jax.lax.rsqrt(jnp.maximum(sq, 1e-24))      # == 1 / max(sqrt(sq), 1e-12)
    o_ref[...] = (h * inv).astype(o_ref.dtype)


@functools.partial(jax.jit, static_argnames=("row_tile",))
def enhanced_encoder(x, params, *, row_tile=256):
    """x: (B, INPUT_SIZE) float32.  params: folded (bf16 W, f32 b) dict."""
    B, fin = x.shape
    in_pad = params["w1"].shape[0]
    out_dim = params["w4"].shape[1]

    # Pad feature dim to 128 lanes (matching zero-padded rows of w1).
    if fin < in_pad:
        x = jnp.pad(x, ((0, 0), (0, in_pad - fin)))

    # Pick a row tile: up to `row_tile` rows per grid step, sublane-aligned (8).
    tm = min(row_tile, _round_up(B, 8))
    b_pad = _round_up(B, tm)
    if b_pad != B:
        x = jnp.pad(x, ((0, b_pad - B), (0, 0)))     # padded rows discarded below
    grid = (b_pad // tm,)

    # Constant index_map => weights/biases resident in VMEM across grid steps.
    def const_spec(arr):
        return pl.BlockSpec(arr.shape, lambda i: (0,) * arr.ndim)

    w_flops = (in_pad * HIDDEN_SIZE + HIDDEN_SIZE * HIDDEN_SIZE
               + HIDDEN_SIZE * (HIDDEN_SIZE // 2)
               + (HIDDEN_SIZE // 2) * (HIDDEN_SIZE // 2))
    w_bytes = sum(int(params[k].size) * params[k].dtype.itemsize
                  for k in ("w1", "w2", "w3", "w4", "b1", "b2", "b3", "b4"))
    cost = pl.CostEstimate(
        flops=2 * b_pad * w_flops,
        transcendentals=b_pad,                        # one rsqrt per row
        bytes_accessed=b_pad * in_pad * 4 + w_bytes + b_pad * out_dim * 4,
    )

    out = pl.pallas_call(
        _encoder_kernel,
        out_shape=jax.ShapeDtypeStruct((b_pad, out_dim), jnp.float32),
        grid=grid,
        in_specs=[
            pl.BlockSpec((tm, in_pad), lambda i: (i, 0)),     # activations stream
            const_spec(params["w1"]), const_spec(params["b1"]),
            const_spec(params["w2"]), const_spec(params["b2"]),
            const_spec(params["w3"]), const_spec(params["b3"]),
            const_spec(params["w4"]), const_spec(params["b4"]),
        ],
        out_specs=pl.BlockSpec((tm, out_dim), lambda i: (i, 0)),
        compiler_params=pltpu.CompilerParams(
            dimension_semantics=("parallel",)),               # megacore on v7x
        cost_estimate=cost,
    )(
        x,
        params["w1"], params["b1"],
        params["w2"], params["b2"],
        params["w3"], params["b3"],
        params["w4"], params["b4"],
    )
    return out[:B]


def make_params(key, input_size, hidden_size):
    """Synthetic eval-mode parameters with BatchNorm folded into each Linear.

    Weights stored transposed (in, out) and cast to bf16; biases kept f32.
    fc1's weight is zero-padded along the input dim 112 -> 128.
    """
    dims = [
        (input_size, hidden_size),              # fc1
        (hidden_size, hidden_size),             # fc2
        (hidden_size, hidden_size // 2),        # fc3
        (hidden_size // 2, hidden_size // 2),   # fc4
    ]
    params = {}
    for i, (fan_in, fan_out) in enumerate(dims, start=1):
        key, kw, kb, kg, kbeta = jax.random.split(key, 5)
        bound = 1.0 / jnp.sqrt(fan_in)
        w = jax.random.uniform(kw, (fan_in, fan_out), jnp.float32, -bound, bound)
        b = jax.random.uniform(kb, (fan_out,), jnp.float32, -bound, bound)
        # BatchNorm1d eval-mode params: running_mean=0, running_var=1
        gamma = 1.0 + 0.1 * jax.random.normal(kg, (fan_out,), jnp.float32)
        beta = 0.1 * jax.random.normal(kbeta, (fan_out,), jnp.float32)
        running_mean = jnp.zeros((fan_out,), jnp.float32)
        running_var = jnp.ones((fan_out,), jnp.float32)
        # Fold BN:  y = (x@W + b) * scale + shift, scale = gamma/sqrt(var+eps)
        scale = gamma / jnp.sqrt(running_var + BN_EPS)
        shift = beta - running_mean * scale
        w_folded = w * scale[None, :]
        b_folded = (b * scale + shift).reshape(1, fan_out)
        if i == 1 and fan_in < INPUT_PAD:
            # zero-pad fc1's input rows 112 -> 128 (matches zero-padded x cols)
            w_folded = jnp.pad(w_folded, ((0, INPUT_PAD - fan_in), (0, 0)))
        params[f"w{i}"] = w_folded.astype(jnp.bfloat16)
        params[f"b{i}"] = b_folded
    # TODO(synk): training-mode BatchNorm (batch statistics) and stochastic Dropout
    # are not reproduced; this kernel implements the deterministic eval-mode forward.
    return params


def reference(x, params):
    """Plain-JAX reference of the same folded (bf16-weight) computation."""
    in_pad = params["w1"].shape[0]
    h = jnp.pad(x, ((0, 0), (0, in_pad - x.shape[1])))
    for i in range(1, 5):
        w = params[f"w{i}"]
        h = jnp.dot(h.astype(w.dtype), w,
                    preferred_element_type=jnp.float32) + params[f"b{i}"]
        if i < 4:
            h = jnp.maximum(h, 0.1 * h)
    denom = jnp.maximum(jnp.sqrt(jnp.sum(h * h, axis=1, keepdims=True)), 1e-12)
    return h / denom


if __name__ == "__main__":
    key = jax.random.PRNGKey(0)
    kx, kp = jax.random.split(key)

    BATCH = 16
    x = jax.random.normal(kx, (BATCH, INPUT_SIZE), jnp.float32)
    params = make_params(kp, INPUT_SIZE, HIDDEN_SIZE)

    # Small row tile here just to exercise the multi-step grid + resident weights;
    # real workloads use the default row_tile=256 to keep the MXU fed.
    out = enhanced_encoder(x, params, row_tile=8)
    out = jax.block_until_ready(out)

    ref = reference(x, params)
    assert out.shape == (BATCH, HIDDEN_SIZE // 2), out.shape
    assert jnp.allclose(out, ref, atol=2e-3, rtol=2e-3), float(
        jnp.max(jnp.abs(out - ref)))
    print("KERNEL_OK")
</pallas_src>

<mosaic_0001>
module attributes {stable_mosaic.version = 11 : i64} {
  func.func @_encoder_kernel(%arg0: i32, %arg1: memref<8x128xf32, #tpu.memory_space<vmem>>, %arg2: memref<128x256xbf16, #tpu.memory_space<vmem>>, %arg3: memref<1x256xf32, #tpu.memory_space<vmem>>, %arg4: memref<256x256xbf16, #tpu.memory_space<vmem>>, %arg5: memref<1x256xf32, #tpu.memory_space<vmem>>, %arg6: memref<256x128xbf16, #tpu.memory_space<vmem>>, %arg7: memref<1x128xf32, #tpu.memory_space<vmem>>, %arg8: memref<128x128xbf16, #tpu.memory_space<vmem>>, %arg9: memref<1x128xf32, #tpu.memory_space<vmem>>, %arg10: memref<8x128xf32, #tpu.memory_space<vmem>>) attributes {dimension_semantics = [#tpu.dimension_semantics<parallel>], iteration_bounds = array<i64: 2>, scalar_prefetch = 0 : i64, scratch_operands = 0 : i64, tpu.core_type = #tpu.core_type<tc>, window_params = [{transform_indices = @transform_0, window_bounds = array<i64: 8, 128>}, {pipeline_mode = #tpu.pipeline_mode<synchronous>, transform_indices = @transform_1, window_bounds = array<i64: 128, 256>}, {pipeline_mode = #tpu.pipeline_mode<synchronous>, transform_indices = @transform_2, window_bounds = array<i64: 1, 256>}, {pipeline_mode = #tpu.pipeline_mode<synchronous>, transform_indices = @transform_3, window_bounds = array<i64: 256, 256>}, {pipeline_mode = #tpu.pipeline_mode<synchronous>, transform_indices = @transform_4, window_bounds = array<i64: 1, 256>}, {pipeline_mode = #tpu.pipeline_mode<synchronous>, transform_indices = @transform_5, window_bounds = array<i64: 256, 128>}, {pipeline_mode = #tpu.pipeline_mode<synchronous>, transform_indices = @transform_6, window_bounds = array<i64: 1, 128>}, {pipeline_mode = #tpu.pipeline_mode<synchronous>, transform_indices = @transform_7, window_bounds = array<i64: 128, 128>}, {pipeline_mode = #tpu.pipeline_mode<synchronous>, transform_indices = @transform_8, window_bounds = array<i64: 1, 128>}, {transform_indices = @transform_9, window_bounds = array<i64: 8, 128>}]} {
    %c0 = arith.constant 0 : index
    %c0_0 = arith.constant 0 : index
    %0 = vector.load %arg1[%c0, %c0_0] : memref<8x128xf32, #tpu.memory_space<vmem>>, vector<8x128xf32>
    %1 = arith.truncf %0 : vector<8x128xf32> to vector<8x128xbf16>
    %c0_1 = arith.constant 0 : index
    %c0_2 = arith.constant 0 : index
    %2 = vector.load %arg2[%c0_1, %c0_2] : memref<128x256xbf16, #tpu.memory_space<vmem>>, vector<128x256xbf16>
    %cst = arith.constant dense<0.000000e+00> : vector<8x256xf32>
    %3 = tpu.matmul %1, %2, %cst {dimension_numbers = #tpu.dot_dimension_numbers<[1], [0], [0], [1], [0, 0, 1, 1], [], []>} : vector<8x128xbf16>, vector<128x256xbf16>, vector<8x256xf32> -> vector<8x256xf32>
    %c0_3 = arith.constant 0 : index
    %c0_4 = arith.constant 0 : index
    %4 = vector.load %arg3[%c0_3, %c0_4] : memref<1x256xf32, #tpu.memory_space<vmem>>, vector<1x256xf32>
    %5 = vector.broadcast %4 : vector<1x256xf32> to vector<8x256xf32>
    %6 = arith.addf %3, %5 : vector<8x256xf32>
    %cst_5 = arith.constant 1.000000e-01 : f32
    %7 = vector.broadcast %cst_5 : f32 to vector<8x256xf32>
    %8 = arith.mulf %7, %6 : vector<8x256xf32>
    %9 = arith.maximumf %6, %8 : vector<8x256xf32>
    %10 = arith.truncf %9 : vector<8x256xf32> to vector<8x256xbf16>
    %c0_6 = arith.constant 0 : index
    %c0_7 = arith.constant 0 : index
    %11 = vector.load %arg4[%c0_6, %c0_7] : memref<256x256xbf16, #tpu.memory_space<vmem>>, vector<256x256xbf16>
    %cst_8 = arith.constant dense<0.000000e+00> : vector<8x256xf32>
    %12 = tpu.matmul %10, %11, %cst_8 {dimension_numbers = #tpu.dot_dimension_numbers<[1], [0], [0], [1], [0, 0, 1, 1], [], []>} : vector<8x256xbf16>, vector<256x256xbf16>, vector<8x256xf32> -> vector<8x256xf32>
    %c0_9 = arith.constant 0 : index
    %c0_10 = arith.constant 0 : index
    %13 = vector.load %arg5[%c0_9, %c0_10] : memref<1x256xf32, #tpu.memory_space<vmem>>, vector<1x256xf32>
    %14 = vector.broadcast %13 : vector<1x256xf32> to vector<8x256xf32>
    %15 = arith.addf %12, %14 : vector<8x256xf32>
    %cst_11 = arith.constant 1.000000e-01 : f32
    %16 = vector.broadcast %cst_11 : f32 to vector<8x256xf32>
    %17 = arith.mulf %16, %15 : vector<8x256xf32>
    %18 = arith.maximumf %15, %17 : vector<8x256xf32>
    %19 = arith.truncf %18 : vector<8x256xf32> to vector<8x256xbf16>
    %c0_12 = arith.constant 0 : index
    %c0_13 = arith.constant 0 : index
    %20 = vector.load %arg6[%c0_12, %c0_13] : memref<256x128xbf16, #tpu.memory_space<vmem>>, vector<256x128xbf16>
    %cst_14 = arith.constant dense<0.000000e+00> : vector<8x128xf32>
    %21 = tpu.matmul %19, %20, %cst_14 {dimension_numbers = #tpu.dot_dimension_numbers<[1], [0], [0], [1], [0, 0, 1, 1], [], []>} : vector<8x256xbf16>, vector<256x128xbf16>, vector<8x128xf32> -> vector<8x128xf32>
    %c0_15 = arith.constant 0 : index
    %c0_16 = arith.constant 0 : index
    %22 = vector.load %arg7[%c0_15, %c0_16] : memref<1x128xf32, #tpu.memory_space<vmem>>, vector<1x128xf32>
    %23 = vector.broadcast %22 : vector<1x128xf32> to vector<8x128xf32>
    %24 = arith.addf %21, %23 : vector<8x128xf32>
    %cst_17 = arith.constant 1.000000e-01 : f32
    %25 = vector.broadcast %cst_17 : f32 to vector<8x128xf32>
    %26 = arith.mulf %25, %24 : vector<8x128xf32>
    %27 = arith.maximumf %24, %26 : vector<8x128xf32>
    %28 = arith.truncf %27 : vector<8x128xf32> to vector<8x128xbf16>
    %c0_18 = arith.constant 0 : index
    %c0_19 = arith.constant 0 : index
    %29 = vector.load %arg8[%c0_18, %c0_19] : memref<128x128xbf16, #tpu.memory_space<vmem>>, vector<128x128xbf16>
    %cst_20 = arith.constant dense<0.000000e+00> : vector<8x128xf32>
    %30 = tpu.matmul %28, %29, %cst_20 {dimension_numbers = #tpu.dot_dimension_numbers<[1], [0], [0], [1], [0, 0, 1, 1], [], []>} : vector<8x128xbf16>, vector<128x128xbf16>, vector<8x128xf32> -> vector<8x128xf32>
    %c0_21 = arith.constant 0 : index
    %c0_22 = arith.constant 0 : index
    %31 = vector.load %arg9[%c0_21, %c0_22] : memref<1x128xf32, #tpu.memory_space<vmem>>, vector<1x128xf32>
    %32 = vector.broadcast %31 : vector<1x128xf32> to vector<8x128xf32>
    %33 = arith.addf %30, %32 : vector<8x128xf32>
    %34 = arith.mulf %33, %33 : vector<8x128xf32>
    %cst_23 = arith.constant dense<0.000000e+00> : vector<8xf32>
    %35 = vector.multi_reduction <add>, %34, %cst_23 [1] : vector<8x128xf32> to vector<8xf32>
    %36 = vector.shape_cast %35 : vector<8xf32> to vector<8x1xf32>
    %cst_24 = arith.constant 1.000000e-24 : f32
    %37 = vector.broadcast %cst_24 : f32 to vector<8x1xf32>
    %38 = arith.maximumf %36, %37 : vector<8x1xf32>
    %39 = math.rsqrt %38 : vector<8x1xf32>
    %40 = vector.broadcast %39 : vector<8x1xf32> to vector<8x128xf32>
    %41 = arith.mulf %33, %40 : vector<8x128xf32>
    %c0_25 = arith.constant 0 : index
    %c0_26 = arith.constant 0 : index
    %42 = vector.load %arg10[%c0_25, %c0_26] : memref<8x128xf32, #tpu.memory_space<vmem>>, vector<8x128xf32>
    tpu.vector_store %arg10[%c0_25, %c0_26], %41 {strides = array<i32>} : memref<8x128xf32, #tpu.memory_space<vmem>>, vector<8x128xf32>,
    return
  }
  func.func @transform_0(%arg0: i32) -> (i32, i32) {
    %c0_i32 = arith.constant 0 : i32
    %c0_i32_0 = arith.constant 0 : i32
    return %arg0, %c0_i32 : i32, i32
  }
  func.func @transform_1(%arg0: i32) -> (i32, i32) {
    %c0_i32 = arith.constant 0 : i32
    %c0_i32_0 = arith.constant 0 : i32
    %c0_i32_1 = arith.constant 0 : i32
    return %c0_i32, %c0_i32_0 : i32, i32
  }
  func.func @transform_2(%arg0: i32) -> (i32, i32) {
    %c0_i32 = arith.constant 0 : i32
    %c0_i32_0 = arith.constant 0 : i32
    %c0_i32_1 = arith.constant 0 : i32
    return %c0_i32, %c0_i32_0 : i32, i32
  }
  func.func @transform_3(%arg0: i32) -> (i32, i32) {
    %c0_i32 = arith.constant 0 : i32
    %c0_i32_0 = arith.constant 0 : i32
    %c0_i32_1 = arith.constant 0 : i32
    return %c0_i32, %c0_i32_0 : i32, i32
  }
  func.func @transform_4(%arg0: i32) -> (i32, i32) {
    %c0_i32 = arith.constant 0 : i32
    %c0_i32_0 = arith.constant 0 : i32
    %c0_i32_1 = arith.constant 0 : i32
    return %c0_i32, %c0_i32_0 : i32, i32
  }
  func.func @transform_5(%arg0: i32) -> (i32, i32) {
    %c0_i32 = arith.constant 0 : i32
    %c0_i32_0 = arith.constant 0 : i32
    %c0_i32_1 = arith.constant 0 : i32
    return %c0_i32, %c0_i32_0 : i32, i32
  }
  func.func @transform_6(%arg0: i32) -> (i32, i32) {
    %c0_i32 = arith.constant 0 : i32
    %c0_i32_0 = arith.constant 0 : i32
    %c0_i32_1 = arith.constant 0 : i32
    return %c0_i32, %c0_i32_0 : i32, i32
  }
  func.func @transform_7(%arg0: i32) -> (i32, i32) {
    %c0_i32 = arith.constant 0 : i32
    %c0_i32_0 = arith.constant 0 : i32
    %c0_i32_1 = arith.constant 0 : i32
    return %c0_i32, %c0_i32_0 : i32, i32
  }
  func.func @transform_8(%arg0: i32) -> (i32, i32) {
    %c0_i32 = arith.constant 0 : i32
    %c0_i32_0 = arith.constant 0 : i32
    %c0_i32_1 = arith.constant 0 : i32
    return %c0_i32, %c0_i32_0 : i32, i32
  }
  func.func @transform_9(%arg0: i32) -> (i32, i32) {
    %c0_i32 = arith.constant 0 : i32
    %c0_i32_0 = arith.constant 0 : i32
    return %arg0, %c0_i32 : i32, i32
  }
}

</mosaic_0001>

<llo_original>
// kernel: enhanced_encoder.1
$region0: #{enhanced_encoder.1}
  #allocation0 [shape = 'u32[]', space=smem, size = 0x4, offset = 0x4, fixed_abs, tag = 'smem constant byte address 0x4 - core index']
  #allocation1 [shape = 'u32[72,128]{1,0:T(1,128)}', space=vmem, size = 0x9000, scoped, tag = 'internal scratch']
  %s0 = inlined_call_operand.vmem [shape: f32[16,128], index: 0, kind: input, shape index: {}]
  %s1 = inlined_call_operand.hbm [shape: bf16[128,256], index: 1, kind: input, shape index: {}]
  %s2 = inlined_call_operand.vmem [shape: f32[1,256], index: 2, kind: input, shape index: {}]
  %s3 = inlined_call_operand.hbm [shape: bf16[256,256], index: 3, kind: input, shape index: {}]
  %s4 = inlined_call_operand.vmem [shape: f32[1,256], index: 4, kind: input, shape index: {}]
  %s5 = inlined_call_operand.hbm [shape: bf16[256,128], index: 5, kind: input, shape index: {}]
  %s6 = inlined_call_operand.vmem [shape: f32[1,128], index: 6, kind: input, shape index: {}]
  %s7 = inlined_call_operand.hbm [shape: bf16[128,128], index: 7, kind: input, shape index: {}]
  %s8 = inlined_call_operand.vmem [shape: f32[1,128], index: 8, kind: input, shape index: {}]
  %s9 = inlined_call_operand.hbm [shape: f32[16,128], index: 9, kind: output, shape index: {}]
  %s10 = sld [smem:[#allocation0]]
  $region85: #{enhanced_encoder.1} parent=0
    _
  %s12 = ssub.s32 1, %s10
  %s13 = scalar_select 0, %s12, %s10
  $region1: #{enhanced_encoder.1} parent=0
    #allocation2 [shape = 'u8[65536]{0}', space=vmem, size = 0x10000, scoped, tag = 'input window, operand 1, single buffered']
    #allocation3 [shape = 's32[2]{0}', space=sflag, size = 0x8, scoped, tag = 'scoped memory for enhanced_encoder.1']
    #allocation4 [shape = 's32[2]{0}', space=sflag, size = 0x8, scoped, tag = 'scoped memory for enhanced_encoder.1']
    #allocation5 [shape = 'u8[131072]{0}', space=vmem, size = 0x20000, scoped, tag = 'input window, operand 3, single buffered']
    #allocation6 [shape = 's32[1]{0}', space=sflag, size = 0x4, scoped, tag = 'scoped memory for enhanced_encoder.1']
    #allocation7 [shape = 'u8[65536]{0}', space=vmem, size = 0x10000, scoped, tag = 'input window, operand 5, single buffered']
    #allocation8 [shape = 'u8[32768]{0}', space=vmem, size = 0x8000, scoped, tag = 'input window, operand 7, single buffered']
    #allocation9 [shape = 's32[1]{0}', space=sflag, size = 0x4, scoped, tag = 'scoped memory for enhanced_encoder.1']
    #allocation10 [shape = 'u8[8192]{0}', space=vmem, size = 0x2000, scoped, tag = 'output window, operand 0']
    %14 = vsyncpa [#allocation3], 0
    %15 = vsyncpa [#allocation6], 0
    %16 = vsyncpa [#allocation9], 0
    %17 = vsyncpa [#allocation4], 0
    %s18 = scalar_lea.sflag [#allocation4], 1
    %19 = vsyncpa %s18, 0
    loop: start=0, step=1, limit=4
    $region2: #{enhanced_encoder.1} parent=1 // loop_pre_header
      _
    $region3: #{enhanced_encoder.1} parent=1 // loop_header
      %s21 = sphi 0, %s25
      %p22 = scmp.ge.s32.totalorder %s21, 4
      %s31 = sphi 0, %s33
      %s34 = sphi 0, %s31
      %s35 = sphi 0, %s34
      %s51 = sphi 0, %s35
      %s55 = sphi 0, %s55
      %s57 = sphi 0, %s55
      %s58 = sphi 0, %s57
      %s72 = sphi 0, %s58
      %s76 = sphi 0, %s76
      %s78 = sphi 0, %s76
      %s79 = sphi 0, %s78
      %s93 = sphi 0, %s79
      %s97 = sphi 0, %s97
      %s99 = sphi 0, %s97
      %s100 = sphi 0, %s99
      %s114 = sphi 0, %s100
      %s118 = sphi 0, %s118
      %s120 = sphi 0, %s118
      %s121 = sphi 0, %s120
      %s135 = sphi 0, %s121
      %s139 = sphi 0, %s139
      %s141 = sphi 0, %s139
      %s142 = sphi 0, %s141
      %s156 = sphi 0, %s142
      %s160 = sphi 0, %s160
      %s162 = sphi 0, %s160
      %s163 = sphi 0, %s162
      %s177 = sphi 0, %s163
      %s181 = sphi 0, %s181
      %s183 = sphi 0, %s181
      %s184 = sphi 0, %s183
      %s198 = sphi 0, %s184
      %s202 = sphi 0, %s202
      %s204 = sphi 0, %s202
      %s205 = sphi 0, %s204
      %s219 = sphi 0, %s205
      %s225 = sphi 0, %s227
      %s228 = sphi 0, %s225
      %s229 = sphi 0, %s228
      %s245 = sphi 0, %s229
    $region4: #{enhanced_encoder.1} parent=1 // loop_header_branch
      %24 = sbr.rel (%p22) target = $region8
    $region5: #{enhanced_encoder.1} parent=1 // loop_body
      %s26 = ssub.s32 %s21, 1
      %s27 = ssub.s32 %s21, 2
      %s28 = sadd.s32 %s21, 1
      %s29 = ssub.s32 %s21, %s28
      %p30 = scmp.eq.s32.totalorder %s29, 0
      %s32 = sadd.s32 %s31, 1
      %s33 = scalar_select %p30, %s31, %s32
      %p36 = pneg %p30
      %p37 = scmp.eq.s32.totalorder %s21, 1
      %p38 = por %p36, %p37
      %p39 = scmp.ne.s32.totalorder %s31, %s34
      %p40 = scmp.eq.s32.totalorder %s21, 0
      %p41 = por %p39, %p40
      %p42 = scmp.ne.s32.totalorder %s31, %s34
      %p43 = scmp.eq.s32.totalorder %s26, 1
      %p44 = por %p42, %p43
      %p45 = scmp.ne.s32.totalorder %s34, %s35
      %p46 = scmp.eq.s32.totalorder %s26, 0
      %p47 = por %p45, %p46
      %p48 = scmp.ne.s32.totalorder %s34, %s35
      %p49 = scmp.eq.s32.totalorder %s27, 1
      %p50 = por %p48, %p49
      %p52 = scmp.ne.s32.totalorder %s35, %s51
      %p53 = scmp.eq.s32.totalorder %s27, 0
      %p54 = por %p52, %p53
      %s56 = sadd.s32 %s55, 1
      %p59 = scmp.eq.s32.totalorder %s21, 1
      %p60 = scmp.ne.s32.totalorder %s55, %s57
      %p61 = scmp.eq.s32.totalorder %s21, 0
      %p62 = por %p60, %p61
      %p63 = scmp.ne.s32.totalorder %s55, %s57
      %p64 = scmp.eq.s32.totalorder %s26, 1
      %p65 = por %p63, %p64
      %p66 = scmp.ne.s32.totalorder %s57, %s58
      %p67 = scmp.eq.s32.totalorder %s26, 0
      %p68 = por %p66, %p67
      %p69 = scmp.ne.s32.totalorder %s57, %s58
      %p70 = scmp.eq.s32.totalorder %s27, 1
      %p71 = por %p69, %p70
      %p73 = scmp.ne.s32.totalorder %s58, %s72
      %p74 = scmp.eq.s32.totalorder %s27, 0
      %p75 = por %p73, %p74
      %s77 = sadd.s32 %s76, 1
      %p80 = scmp.eq.s32.totalorder %s21, 1
      %p81 = scmp.ne.s32.totalorder %s76, %s78
      %p82 = scmp.eq.s32.totalorder %s21, 0
      %p83 = por %p81, %p82
      %p84 = scmp.ne.s32.totalorder %s76, %s78
      %p85 = scmp.eq.s32.totalorder %s26, 1
      %p86 = por %p84, %p85
      %p87 = scmp.ne.s32.totalorder %s78, %s79
      %p88 = scmp.eq.s32.totalorder %s26, 0
      %p89 = por %p87, %p88
      %p90 = scmp.ne.s32.totalorder %s78, %s79
      %p91 = scmp.eq.s32.totalorder %s27, 1
      %p92 = por %p90, %p91
      %p94 = scmp.ne.s32.totalorder %s79, %s93
      %p95 = scmp.eq.s32.totalorder %s27, 0
      %p96 = por %p94, %p95
      %s98 = sadd.s32 %s97, 1
      %p101 = scmp.eq.s32.totalorder %s21, 1
      %p102 = scmp.ne.s32.totalorder %s97, %s99
      %p103 = scmp.eq.s32.totalorder %s21, 0
      %p104 = por %p102, %p103
      %p105 = scmp.ne.s32.totalorder %s97, %s99
      %p106 = scmp.eq.s32.totalorder %s26, 1
      %p107 = por %p105, %p106
      %p108 = scmp.ne.s32.totalorder %s99, %s100
      %p109 = scmp.eq.s32.totalorder %s26, 0
      %p110 = por %p108, %p109
      %p111 = scmp.ne.s32.totalorder %s99, %s100
      %p112 = scmp.eq.s32.totalorder %s27, 1
      %p113 = por %p111, %p112
      %p115 = scmp.ne.s32.totalorder %s100, %s114
      %p116 = scmp.eq.s32.totalorder %s27, 0
      %p117 = por %p115, %p116
      %s119 = sadd.s32 %s118, 1
      %p122 = scmp.eq.s32.totalorder %s21, 1
      %p123 = scmp.ne.s32.totalorder %s118, %s120
      %p124 = scmp.eq.s32.totalorder %s21, 0
      %p125 = por %p123, %p124
      %p126 = scmp.ne.s32.totalorder %s118, %s120
      %p127 = scmp.eq.s32.totalorder %s26, 1
      %p128 = por %p126, %p127
      %p129 = scmp.ne.s32.totalorder %s120, %s121
      %p130 = scmp.eq.s32.totalorder %s26, 0
      %p131 = por %p129, %p130
      %p132 = scmp.ne.s32.totalorder %s120, %s121
      %p133 = scmp.eq.s32.totalorder %s27, 1
      %p134 = por %p132, %p133
      %p136 = scmp.ne.s32.totalorder %s121, %s135
      %p137 = scmp.eq.s32.totalorder %s27, 0
      %p138 = por %p136, %p137
      %s140 = sadd.s32 %s139, 1
      %p143 = scmp.eq.s32.totalorder %s21, 1
      %p144 = scmp.ne.s32.totalorder %s139, %s141
      %p145 = scmp.eq.s32.totalorder %s21, 0
      %p146 = por %p144, %p145
      %p147 = scmp.ne.s32.totalorder %s139, %s141
      %p148 = scmp.eq.s32.totalorder %s26, 1
      %p149 = por %p147, %p148
      %p150 = scmp.ne.s32.totalorder %s141, %s142
      %p151 = scmp.eq.s32.totalorder %s26, 0
      %p152 = por %p150, %p151
      %p153 = scmp.ne.s32.totalorder %s141, %s142
      %p154 = scmp.eq.s32.totalorder %s27, 1
      %p155 = por %p153, %p154
      %p157 = scmp.ne.s32.totalorder %s142, %s156
      %p158 = scmp.eq.s32.totalorder %s27, 0
      %p159 = por %p157, %p158
      %s161 = sadd.s32 %s160, 1
      %p164 = scmp.eq.s32.totalorder %s21, 1
      %p165 = scmp.ne.s32.totalorder %s160, %s162
      %p166 = scmp.eq.s32.totalorder %s21, 0
      %p167 = por %p165, %p166
      %p168 = scmp.ne.s32.totalorder %s160, %s162
      %p169 = scmp.eq.s32.totalorder %s26, 1
      %p170 = por %p168, %p169
      %p171 = scmp.ne.s32.totalorder %s162, %s163
      %p172 = scmp.eq.s32.totalorder %s26, 0
      %p173 = por %p171, %p172
      %p174 = scmp.ne.s32.totalorder %s162, %s163
      %p175 = scmp.eq.s32.totalorder %s27, 1
      %p176 = por %p174, %p175
      %p178 = scmp.ne.s32.totalorder %s163, %s177
      %p179 = scmp.eq.s32.totalorder %s27, 0
      %p180 = por %p178, %p179
      %s182 = sadd.s32 %s181, 1
      %p185 = scmp.eq.s32.totalorder %s21, 1
      %p186 = scmp.ne.s32.totalorder %s181, %s183
      %p187 = scmp.eq.s32.totalorder %s21, 0
      %p188 = por %p186, %p187
      %p189 = scmp.ne.s32.totalorder %s181, %s183
      %p190 = scmp.eq.s32.totalorder %s26, 1
      %p191 = por %p189, %p190
      %p192 = scmp.ne.s32.totalorder %s183, %s184
      %p193 = scmp.eq.s32.totalorder %s26, 0
      %p194 = por %p192, %p193
      %p195 = scmp.ne.s32.totalorder %s183, %s184
      %p196 = scmp.eq.s32.totalorder %s27, 1
      %p197 = por %p195, %p196
      %p199 = scmp.ne.s32.totalorder %s184, %s198
      %p200 = scmp.eq.s32.totalorder %s27, 0
      %p201 = por %p199, %p200
      %s203 = sadd.s32 %s202, 1
      %p206 = scmp.eq.s32.totalorder %s21, 1
      %p207 = scmp.ne.s32.totalorder %s202, %s204
      %p208 = scmp.eq.s32.totalorder %s21, 0
      %p209 = por %p207, %p208
      %p210 = scmp.ne.s32.totalorder %s202, %s204
      %p211 = scmp.eq.s32.totalorder %s26, 1
      %p212 = por %p210, %p211
      %p213 = scmp.ne.s32.totalorder %s204, %s205
      %p214 = scmp.eq.s32.totalorder %s26, 0
      %p215 = por %p213, %p214
      %p216 = scmp.ne.s32.totalorder %s204, %s205
      %p217 = scmp.eq.s32.totalorder %s27, 1
      %p218 = por %p216, %p217
      %p220 = scmp.ne.s32.totalorder %s205, %s219
      %p221 = scmp.eq.s32.totalorder %s27, 0
      %p222 = por %p220, %p221
      %s223 = ssub.s32 %s21, %s28
      %p224 = scmp.eq.s32.totalorder %s223, 0
      %s226 = sadd.s32 %s225, 1
      %s227 = scalar_select %p224, %s225, %s226
      %p230 = pneg %p224
      %p231 = scmp.eq.s32.totalorder %s21, 1
      %p232 = por %p230, %p231
      %p233 = scmp.ne.s32.totalorder %s225, %s228
      %p234 = scmp.eq.s32.totalorder %s21, 0
      %p235 = por %p233, %p234
      %p236 = scmp.ne.s32.totalorder %s225, %s228
      %p237 = scmp.eq.s32.totalorder %s26, 1
      %p238 = por %p236, %p237
      %p239 = scmp.ne.s32.totalorder %s228, %s229
      %p240 = scmp.eq.s32.totalorder %s26, 0
      %p241 = por %p239, %p240
      %p242 = scmp.ne.s32.totalorder %s228, %s229
      %p243 = scmp.eq.s32.totalorder %s27, 1
      %p244 = por %p242, %p243
      %p246 = scmp.ne.s32.totalorder %s229, %s245
      %p247 = scmp.eq.s32.totalorder %s27, 0
      %p248 = por %p246, %p247
      %p249 = scmp.le.s32.totalorder 1, %s21
      %p250 = scmp.lt.s32.totalorder %s21, 3
      %p251 = pnand %p249, %p250
      %p252 = pneg %p251
      // Predicated region
      $region9: #{enhanced_encoder.1} parent=5 // pred_check
        _
      $region10: #{enhanced_encoder.1} parent=5 // pred_check_branch
        %254 = sbr.rel (%p251) target = $region12
      $region11: #{enhanced_encoder.1} parent=5 // pred_region
        %s255 = ssub.s32 %s21, 1
        // Predicated region
        $region13: #{enhanced_encoder.1} parent=11 // pred_check
          %p256 = pneg %p68
        $region14: #{enhanced_encoder.1} parent=11 // pred_check_branch
          %258 = sbr.rel (%p256) target = $region16
        $region15: #{enhanced_encoder.1} parent=11 // pred_region
          %260 = vsyncadd [#allocation3], 0
          %s261 = sshll.u32 %s1, 4
          %s262 = int_to_ptr.hbm [resolvable:$true] %s261
          %s263 = sshll.u32 [#allocation2], 4
          %s264 = int_to_ptr.vmem [resolvable:$true] %s263
          %269 = dma.hbm_to_vmem [thread:$0]  %s262, 2048, %s264, [#allocation3], 128, 128, 8
        $region16: #{enhanced_encoder.1} parent=11 // pred_fallthru
          _
        // Predicated region
        $region17: #{enhanced_encoder.1} parent=11 // pred_check
          %p270 = pneg %p89
        $region18: #{enhanced_encoder.1} parent=11 // pred_check_branch
          %272 = sbr.rel (%p270) target = $region20
        $region19: #{enhanced_encoder.1} parent=11 // pred_region
          _
        $region20: #{enhanced_encoder.1} parent=11 // pred_fallthru
          _
        // Predicated region
        $region21: #{enhanced_encoder.1} parent=11 // pred_check
          %p273 = pneg %p110
        $region22: #{enhanced_encoder.1} parent=11 // pred_check_branch
          %275 = sbr.rel (%p273) target = $region24
        $region23: #{enhanced_encoder.1} parent=11 // pred_region
          %277 = vsyncadd [#allocation6], 0
          %s278 = sshll.u32 %s3, 4
          %s279 = int_to_ptr.hbm [resolvable:$true] %s278
          %s280 = sshll.u32 [#allocation5], 4
          %s281 = int_to_ptr.vmem [resolvable:$true] %s280
          %286 = dma.hbm_to_vmem [thread:$0]  %s279, 4096, %s281, [#allocation6], 128, 128, 8
        $region24: #{enhanced_encoder.1} parent=11 // pred_fallthru
          _
        // Predicated region
        $region25: #{enhanced_encoder.1} parent=11 // pred_check
          %p287 = pneg %p131
        $region26: #{enhanced_encoder.1} parent=11 // pred_check_branch
          %289 = sbr.rel (%p287) target = $region28
        $region27: #{enhanced_encoder.1} parent=11 // pred_region
          _
        $region28: #{enhanced_encoder.1} parent=11 // pred_fallthru
          _
        // Predicated region
        $region29: #{enhanced_encoder.1} parent=11 // pred_check
          %p290 = pneg %p152
        $region30: #{enhanced_encoder.1} parent=11 // pred_check_branch
          %292 = sbr.rel (%p290) target = $region32
        $region31: #{enhanced_encoder.1} parent=11 // pred_region
          %294 = vsyncadd [#allocation6], 0
          %s295 = sshll.u32 %s5, 4
          %s296 = int_to_ptr.hbm [resolvable:$true] %s295
          %s297 = sshll.u32 [#allocation7], 4
          %s298 = int_to_ptr.vmem [resolvable:$true] %s297
          %303 = dma.hbm_to_vmem [thread:$0]  %s296, 2048, %s298, [#allocation6], 64, 64, 4
        $region32: #{enhanced_encoder.1} parent=11 // pred_fallthru
          _
        // Predicated region
        $region33: #{enhanced_encoder.1} parent=11 // pred_check
          %p304 = pneg %p173
        $region34: #{enhanced_encoder.1} parent=11 // pred_check_branch
          %306 = sbr.rel (%p304) target = $region36
        $region35: #{enhanced_encoder.1} parent=11 // pred_region
          _
        $region36: #{enhanced_encoder.1} parent=11 // pred_fallthru
          _
        // Predicated region
        $region37: #{enhanced_encoder.1} parent=11 // pred_check
          %p307 = pneg %p194
        $region38: #{enhanced_encoder.1} parent=11 // pred_check_branch
          %309 = sbr.rel (%p307) target = $region40
        $region39: #{enhanced_encoder.1} parent=11 // pred_region
          %311 = vsyncadd [#allocation9], 0
          %s312 = sshll.u32 %s7, 4
          %s313 = int_to_ptr.hbm [resolvable:$true] %s312
          %s314 = sshll.u32 [#allocation8], 4
          %s315 = int_to_ptr.vmem [resolvable:$true] %s314
          %320 = dma.hbm_to_vmem [thread:$0]  %s313, 1024, %s315, [#allocation9], 64, 64, 4
        $region40: #{enhanced_encoder.1} parent=11 // pred_fallthru
          _
        // Predicated region
        $region41: #{enhanced_encoder.1} parent=11 // pred_check
          %p321 = pneg %p215
        $region42: #{enhanced_encoder.1} parent=11 // pred_check_branch
          %323 = sbr.rel (%p321) target = $region44
        $region43: #{enhanced_encoder.1} parent=11 // pred_region
          _
        $region44: #{enhanced_encoder.1} parent=11 // pred_fallthru
          _
      $region12: #{enhanced_encoder.1} parent=5 // pred_fallthru
        _
      %p324 = scmp.lt.s32.totalorder %s21, 2
      // Predicated region
      $region45: #{enhanced_encoder.1} parent=5 // pred_check
        %p325 = pneg %p324
      $region46: #{enhanced_encoder.1} parent=5 // pred_check_branch
        %327 = sbr.rel (%p325) target = $region48
      $region47: #{enhanced_encoder.1} parent=5 // pred_region
        // Predicated region
        $region49: #{enhanced_encoder.1} parent=47 // pred_check
          %p328 = pneg %p41
        $region50: #{enhanced_encoder.1} parent=47 // pred_check_branch
          %330 = sbr.rel (%p328) target = $region52
        $region51: #{enhanced_encoder.1} parent=47 // pred_region
          %p331 = scmp.lt.s32.totalorder %s21, 1
          %s332 = scalar_select %p331, %s21, 1
          %s333 = smul.addr %s332, 8
          %s334 = scalar_lea.vmem %s0, %s333
        $region52: #{enhanced_encoder.1} parent=47 // pred_fallthru
          _
      $region48: #{enhanced_encoder.1} parent=5 // pred_fallthru
        _
      %p335 = scmp.le.s32.totalorder 1, %s21
      %p336 = scmp.lt.s32.totalorder %s21, 3
      %p337 = pnand %p335, %p336
      %p338 = pneg %p337
      // Predicated region
      $region53: #{enhanced_encoder.1} parent=5 // pred_check
        _
      $region54: #{enhanced_encoder.1} parent=5 // pred_check_branch
        %340 = sbr.rel (%p337) target = $region56
      $region55: #{enhanced_encoder.1} parent=5 // pred_region
        %s341 = ssub.s32 %s21, 1
        // Predicated region
        $region57: #{enhanced_encoder.1} parent=55 // pred_check
          %p342 = pneg %p68
        $region58: #{enhanced_encoder.1} parent=55 // pred_check_branch
          %344 = sbr.rel (%p342) target = $region60
        $region59: #{enhanced_encoder.1} parent=55 // pred_region
          %346 = dma.done [#allocation3], 2048
        $region60: #{enhanced_encoder.1} parent=55 // pred_fallthru
          _
        // Predicated region
        $region61: #{enhanced_encoder.1} parent=55 // pred_check
          %p347 = pneg %p110
        $region62: #{enhanced_encoder.1} parent=55 // pred_check_branch
          %349 = sbr.rel (%p347) target = $region64
        $region63: #{enhanced_encoder.1} parent=55 // pred_region
          %351 = dma.done [#allocation6], 4096
        $region64: #{enhanced_encoder.1} parent=55 // pred_fallthru
          _
        // Predicated region
        $region65: #{enhanced_encoder.1} parent=55 // pred_check
          %p352 = pneg %p152
        $region66: #{enhanced_encoder.1} parent=55 // pred_check_branch
          %354 = sbr.rel (%p352) target = $region68
        $region67: #{enhanced_encoder.1} parent=55 // pred_region
          %356 = dma.done [#allocation6], 2048
        $region68: #{enhanced_encoder.1} parent=55 // pred_fallthru
          _
        // Predicated region
        $region69: #{enhanced_encoder.1} parent=55 // pred_check
          %p357 = pneg %p194
        $region70: #{enhanced_encoder.1} parent=55 // pred_check_branch
          %359 = sbr.rel (%p357) target = $region72
        $region71: #{enhanced_encoder.1} parent=55 // pred_region
          %361 = dma.done [#allocation9], 1024
        $region72: #{enhanced_encoder.1} parent=55 // pred_fallthru
          _
        %p362 = scmp.lt.s32.totalorder %s26, 1
        %s363 = scalar_select %p362, %s26, 1
        %s364 = smul.addr %s363, 8
        %s365 = scalar_lea.vmem %s0, %s364
        %p366 = pneg %p47
        %p367 = pneg %p44
        %p368 = pneg %p68
        %p369 = pneg %p65
        %p370 = pneg %p89
        %p371 = pneg %p86
        %p372 = pneg %p110
        %p373 = pneg %p107
        %p374 = pneg %p131
        %p375 = pneg %p128
        %p376 = pneg %p152
        %p377 = pneg %p149
        %p378 = pneg %p173
        %p379 = pneg %p170
        %p380 = pneg %p194
        %p381 = pneg %p191
        %p382 = pneg %p215
        %p383 = pneg %p212
        %p384 = pneg %p241
        %p385 = pneg %p238
        %s386 = sand.u32 %s228, 1
        %s387 = scalar_lea.sflag [#allocation4], %s386
        %s388 = sand.u32 %s228, 1
        %s389 = smul.addr %s388, 8
        %s390 = scalar_lea.vmem [#allocation10], %s389
        %p391 = scmp.lt.s32.totalorder %s26, 1
        %s392 = scalar_select %p391, %s26, 1
        %s393 = smul.addr %s392, 8
        %s394 = scalar_lea.vmem %s0, %s393
        %v395 = vld [vmem:[%s394] sm:$0xff]
        %v396 = vpack.c.bf16 %v395, %v395
        %v397 = vld [vmem:[#allocation2] sm:$0xff]
        %v398 = vld [vmem:[#allocation2 + $0x8] sm:$0xff]
        %v399 = vld [vmem:[#allocation2 + $0x10] sm:$0xff]
        %v400 = vld [vmem:[#allocation2 + $0x18] sm:$0xff]
        %v401 = vld [vmem:[#allocation2 + $0x20] sm:$0xff]
        %v402 = vld [vmem:[#allocation2 + $0x28] sm:$0xff]
        %v403 = vld [vmem:[#allocation2 + $0x30] sm:$0xff]
        %v404 = vld [vmem:[#allocation2 + $0x38] sm:$0xff]
        %v405 = vld [vmem:[#allocation2 + $0x40] sm:$0xff]
        %v406 = vld [vmem:[#allocation2 + $0x48] sm:$0xff]
        %v407 = vld [vmem:[#allocation2 + $0x50] sm:$0xff]
        %v408 = vld [vmem:[#allocation2 + $0x58] sm:$0xff]
        %v409 = vld [vmem:[#allocation2 + $0x60] sm:$0xff]
        %v410 = vld [vmem:[#allocation2 + $0x68] sm:$0xff]
        %v411 = vld [vmem:[#allocation2 + $0x70] sm:$0xff]
        %v412 = vld [vmem:[#allocation2 + $0x78] sm:$0xff]
        %v413 = vld [vmem:[%s2] sm:$0x3]
        %v415 = vperm.slane %v413, 0
        %v416 = vperm.slane %v413, 1
        %v435 = vunpack.c.l.b16 %v397
        %v436 = vunpack.c.h.b16 %v397
        %v437 = vunpack.c.l.b16 %v398
        %v438 = vunpack.c.h.b16 %v398
        %v439 = vunpack.c.l.b16 %v399
        %v440 = vunpack.c.h.b16 %v399
        %v441 = vunpack.c.l.b16 %v400
        %v442 = vunpack.c.h.b16 %v400
        %v443 = vunpack.c.l.b16 %v401
        %v444 = vunpack.c.h.b16 %v401
        %v445 = vunpack.c.l.b16 %v402
        %v446 = vunpack.c.h.b16 %v402
        %v447 = vunpack.c.l.b16 %v403
        %v448 = vunpack.c.h.b16 %v403
        %v449 = vunpack.c.l.b16 %v404
        %v450 = vunpack.c.h.b16 %v404
        %v451 = vunpack.c.l.b16 %v405
        %v452 = vunpack.c.h.b16 %v405
        %v453 = vunpack.c.l.b16 %v406
        %v454 = vunpack.c.h.b16 %v406
        %v455 = vunpack.c.l.b16 %v407
        %v456 = vunpack.c.h.b16 %v407
        %v457 = vunpack.c.l.b16 %v408
        %v458 = vunpack.c.h.b16 %v408
        %v459 = vunpack.c.l.b16 %v409
        %v460 = vunpack.c.h.b16 %v409
        %v461 = vunpack.c.l.b16 %v410
        %v462 = vunpack.c.h.b16 %v410
        %v463 = vunpack.c.l.b16 %v411
        %v464 = vunpack.c.h.b16 %v411
        %v465 = vunpack.c.l.b16 %v412
        %v466 = vunpack.c.h.b16 %v412
        %v467 = vpack.c.b16 %v437, %v435
        %v468 = vpack.c.b16 %v438, %v436
        %v469 = vpack.c.b16 %v441, %v439
        %v470 = vpack.c.b16 %v442, %v440
        %v471 = vpack.c.b16 %v445, %v443
        %v472 = vpack.c.b16 %v446, %v444
        %v473 = vpack.c.b16 %v449, %v447
        %v474 = vpack.c.b16 %v450, %v448
        %v475 = vpack.c.b16 %v453, %v451
        %v476 = vpack.c.b16 %v454, %v452
        %v477 = vpack.c.b16 %v457, %v455
        %v478 = vpack.c.b16 %v458, %v456
        %v479 = vpack.c.b16 %v461, %v459
        %v480 = vpack.c.b16 %v462, %v460
        %v481 = vpack.c.b16 %v465, %v463
        %v482 = vpack.c.b16 %v466, %v464
        %499 = vmatpush.bf16.msra.mxu0 %v481
        %500 = vmatpush.bf16.msra.mxu0 %v479
        %501 = vmatpush.bf16.msra.mxu0 %v477
        %502 = vmatpush.bf16.msra.mxu0 %v475
        %503 = vmatpush.bf16.msra.mxu0 %v473
        %504 = vmatpush.bf16.msra.mxu0 %v471
        %505 = vmatpush.bf16.msra.mxu0 %v469
        %506 = vmatpush.bf16.msra.mxu0 %v467
        %507 = vmatmul.bf16.gmra.mxu0 %v396
        %v508 = vpop.f32.mrf.mxu0
        %v509 = vadd.f32 %v415, %v508
        %v510 = vpop.f32.mrf.mxu0
        %511 = vdwg.mxu0
        %512 = vmatpush.bf16.msra.mxu0 %v482
        %513 = vmatpush.bf16.msra.mxu0 %v480
        %514 = vmatpush.bf16.msra.mxu0 %v478
        %515 = vmatpush.bf16.msra.mxu0 %v476
        %516 = vmatpush.bf16.msra.mxu0 %v474
        %517 = vmatpush.bf16.msra.mxu0 %v472
        %518 = vmatpush.bf16.msra.mxu0 %v470
        %519 = vmatpush.bf16.msra.mxu0 %v468
        %520 = vmatmul.bf16.gmra.mxu0 %v396
        %v521 = vpop.f32.mrf.mxu0
        %v522 = vadd.f32 %v416, %v521
        %v523 = vpop.f32.mrf.mxu0
        %524 = vdwg.mxu0
        %v525 = vmul.f32 %v509, 0.1
        %v526 = vmul.f32 %v522, 0.1
        %v527 = vmax.f32 %v509, %v525
        %v528 = vmax.f32 %v522, %v526
        %v529 = vpack.c.bf16 %v527, %v527
        %v530 = vpack.c.bf16 %v528, %v528
        %v531 = vld [vmem:[#allocation5] sm:$0xff]
        %v532 = vld [vmem:[#allocation5 + $0x8] sm:$0xff]
        %v533 = vld [vmem:[#allocation5 + $0x10] sm:$0xff]
        %v534 = vld [vmem:[#allocation5 + $0x18] sm:$0xff]
        %v535 = vld [vmem:[#allocation5 + $0x20] sm:$0xff]
        %v536 = vld [vmem:[#allocation5 + $0x28] sm:$0xff]
        %v537 = vld [vmem:[#allocation5 + $0x30] sm:$0xff]
        %v538 = vld [vmem:[#allocation5 + $0x38] sm:$0xff]
        %v539 = vld [vmem:[#allocation5 + $0x40] sm:$0xff]
        %v540 = vld [vmem:[#allocation5 + $0x48] sm:$0xff]
        %v541 = vld [vmem:[#allocation5 + $0x50] sm:$0xff]
        %v542 = vld [vmem:[#allocation5 + $0x58] sm:$0xff]
        %v543 = vld [vmem:[#allocation5 + $0x60] sm:$0xff]
        %v544 = vld [vmem:[#allocation5 + $0x68] sm:$0xff]
        %v545 = vld [vmem:[#allocation5 + $0x70] sm:$0xff]
        %v546 = vld [vmem:[#allocation5 + $0x78] sm:$0xff]
        %v547 = vld [vmem:[#allocation5 + $0x80] sm:$0xff]
        %v548 = vld [vmem:[#allocation5 + $0x88] sm:$0xff]
        %v549 = vld [vmem:[#allocation5 + $0x90] sm:$0xff]
        %v550 = vld [vmem:[#allocation5 + $0x98] sm:$0xff]
        %v551 = vld [vmem:[#allocation5 + $0xa0] sm:$0xff]
        %v552 = vld [vmem:[#allocation5 + $0xa8] sm:$0xff]
        %v553 = vld [vmem:[#allocation5 + $0xb0] sm:$0xff]
        %v554 = vld [vmem:[#allocation5 + $0xb8] sm:$0xff]
        %v555 = vld [vmem:[#allocation5 + $0xc0] sm:$0xff]
        %v556 = vld [vmem:[#allocation5 + $0xc8] sm:$0xff]
        %v557 = vld [vmem:[#allocation5 + $0xd0] sm:$0xff]
        %v558 = vld [vmem:[#allocation5 + $0xd8] sm:$0xff]
        %v559 = vld [vmem:[#allocation5 + $0xe0] sm:$0xff]
        %v560 = vld [vmem:[#allocation5 + $0xe8] sm:$0xff]
        %v561 = vld [vmem:[#allocation5 + $0xf0] sm:$0xff]
        %v562 = vld [vmem:[#allocation5 + $0xf8] sm:$0xff]
        %v563 = vld [vmem:[%s4] sm:$0x3]
        %v565 = vperm.slane %v563, 0
        %v566 = vperm.slane %v563, 1
        %v601 = vunpack.c.l.b16 %v531
        %v602 = vunpack.c.h.b16 %v531
        %v603 = vunpack.c.l.b16 %v532
        %v604 = vunpack.c.h.b16 %v532
        %v605 = vunpack.c.l.b16 %v533
        %v606 = vunpack.c.h.b16 %v533
        %v607 = vunpack.c.l.b16 %v534
        %v608 = vunpack.c.h.b16 %v534
        %v609 = vunpack.c.l.b16 %v535
        %v610 = vunpack.c.h.b16 %v535
        %v611 = vunpack.c.l.b16 %v536
        %v612 = vunpack.c.h.b16 %v536
        %v613 = vunpack.c.l.b16 %v537
        %v614 = vunpack.c.h.b16 %v537
        %v615 = vunpack.c.l.b16 %v538
        %v616 = vunpack.c.h.b16 %v538
        %v617 = vunpack.c.l.b16 %v539
        %v618 = vunpack.c.h.b16 %v539
        %v619 = vunpack.c.l.b16 %v540
        %v620 = vunpack.c.h.b16 %v540
        %v621 = vunpack.c.l.b16 %v541
        %v622 = vunpack.c.h.b16 %v541
        %v623 = vunpack.c.l.b16 %v542
        %v624 = vunpack.c.h.b16 %v542
        %v625 = vunpack.c.l.b16 %v543
        %v626 = vunpack.c.h.b16 %v543
        %v627 = vunpack.c.l.b16 %v544
        %v628 = vunpack.c.h.b16 %v544
        %v629 = vunpack.c.l.b16 %v545
        %v630 = vunpack.c.h.b16 %v545
        %v631 = vunpack.c.l.b16 %v546
        %v632 = vunpack.c.h.b16 %v546
        %v633 = vunpack.c.l.b16 %v547
        %v634 = vunpack.c.h.b16 %v547
        %v635 = vunpack.c.l.b16 %v548
        %v636 = vunpack.c.h.b16 %v548
        %v637 = vunpack.c.l.b16 %v549
        %v638 = vunpack.c.h.b16 %v549
        %v639 = vunpack.c.l.b16 %v550
        %v640 = vunpack.c.h.b16 %v550
        %v641 = vunpack.c.l.b16 %v551
        %v642 = vunpack.c.h.b16 %v551
        %v643 = vunpack.c.l.b16 %v552
        %v644 = vunpack.c.h.b16 %v552
        %v645 = vunpack.c.l.b16 %v553
        %v646 = vunpack.c.h.b16 %v553
        %v647 = vunpack.c.l.b16 %v554
        %v648 = vunpack.c.h.b16 %v554
        %v649 = vunpack.c.l.b16 %v555
        %v650 = vunpack.c.h.b16 %v555
        %v651 = vunpack.c.l.b16 %v556
        %v652 = vunpack.c.h.b16 %v556
        %v653 = vunpack.c.l.b16 %v557
        %v654 = vunpack.c.h.b16 %v557
        %v655 = vunpack.c.l.b16 %v558
        %v656 = vunpack.c.h.b16 %v558
        %v657 = vunpack.c.l.b16 %v559
        %v658 = vunpack.c.h.b16 %v559
        %v659 = vunpack.c.l.b16 %v560
        %v660 = vunpack.c.h.b16 %v560
        %v661 = vunpack.c.l.b16 %v561
        %v662 = vunpack.c.h.b16 %v561
        %v663 = vunpack.c.l.b16 %v562
        %v664 = vunpack.c.h.b16 %v562
        %v665 = vpack.c.b16 %v603, %v601
        %v666 = vpack.c.b16 %v604, %v602
        %v667 = vpack.c.b16 %v607, %v605
        %v668 = vpack.c.b16 %v608, %v606
        %v669 = vpack.c.b16 %v611, %v609
        %v670 = vpack.c.b16 %v612, %v610
        %v671 = vpack.c.b16 %v615, %v613
        %v672 = vpack.c.b16 %v616, %v614
        %v673 = vpack.c.b16 %v619, %v617
        %v674 = vpack.c.b16 %v620, %v618
        %v675 = vpack.c.b16 %v623, %v621
        %v676 = vpack.c.b16 %v624, %v622
        %v677 = vpack.c.b16 %v627, %v625
        %v678 = vpack.c.b16 %v628, %v626
        %v679 = vpack.c.b16 %v631, %v629
        %v680 = vpack.c.b16 %v632, %v630
        %v681 = vpack.c.b16 %v635, %v633
        %v682 = vpack.c.b16 %v636, %v634
        %v683 = vpack.c.b16 %v639, %v637
        %v684 = vpack.c.b16 %v640, %v638
        %v685 = vpack.c.b16 %v643, %v641
        %v686 = vpack.c.b16 %v644, %v642
        %v687 = vpack.c.b16 %v647, %v645
        %v688 = vpack.c.b16 %v648, %v646
        %v689 = vpack.c.b16 %v651, %v649
        %v690 = vpack.c.b16 %v652, %v650
        %v691 = vpack.c.b16 %v655, %v653
        %v692 = vpack.c.b16 %v656, %v654
        %v693 = vpack.c.b16 %v659, %v657
        %v694 = vpack.c.b16 %v660, %v658
        %v695 = vpack.c.b16 %v663, %v661
        %v696 = vpack.c.b16 %v664, %v662
        %729 = vmatpush.bf16.msra.mxu0 %v679
        %730 = vmatpush.bf16.msra.mxu0 %v677
        %731 = vmatpush.bf16.msra.mxu0 %v675
        %732 = vmatpush.bf16.msra.mxu0 %v673
        %733 = vmatpush.bf16.msra.mxu0 %v671
        %734 = vmatpush.bf16.msra.mxu0 %v669
        %735 = vmatpush.bf16.msra.mxu0 %v667
        %736 = vmatpush.bf16.msra.mxu0 %v665
        %737 = vmatmul.bf16.gmra.mxu0 %v529
        %v738 = vpop.f32.mrf.mxu0
        %v739 = vadd.f32 %v565, %v738
        %v740 = vpop.f32.mrf.mxu0
        %741 = vdwg.mxu0
        %742 = vmatpush.bf16.msra.mxu0 %v695
        %743 = vmatpush.bf16.msra.mxu0 %v693
        %744 = vmatpush.bf16.msra.mxu0 %v691
        %745 = vmatpush.bf16.msra.mxu0 %v689
        %746 = vmatpush.bf16.msra.mxu0 %v687
        %747 = vmatpush.bf16.msra.mxu0 %v685
        %748 = vmatpush.bf16.msra.mxu0 %v683
        %749 = vmatpush.bf16.msra.mxu0 %v681
        %750 = vmatmul.bf16.gmra.mxu0 %v530
        %v751 = vpop.f32.mrf.mxu0
        %v752 = vadd.f32 %v739, %v751
        %v753 = vpop.f32.mrf.mxu0
        %754 = vdwg.mxu0
        %755 = vmatpush.bf16.msra.mxu0 %v680
        %756 = vmatpush.bf16.msra.mxu0 %v678
        %757 = vmatpush.bf16.msra.mxu0 %v676
        %758 = vmatpush.bf16.msra.mxu0 %v674
        %759 = vmatpush.bf16.msra.mxu0 %v672
        %760 = vmatpush.bf16.msra.mxu0 %v670
        %761 = vmatpush.bf16.msra.mxu0 %v668
        %762 = vmatpush.bf16.msra.mxu0 %v666
        %763 = vmatmul.bf16.gmra.mxu0 %v529
        %v764 = vpop.f32.mrf.mxu0
        %v765 = vadd.f32 %v566, %v764
        %v766 = vpop.f32.mrf.mxu0
        %767 = vdwg.mxu0
        %768 = vmatpush.bf16.msra.mxu0 %v696
        %769 = vmatpush.bf16.msra.mxu0 %v694
        %770 = vmatpush.bf16.msra.mxu0 %v692
        %771 = vmatpush.bf16.msra.mxu0 %v690
        %772 = vmatpush.bf16.msra.mxu0 %v688
        %773 = vmatpush.bf16.msra.mxu0 %v686
        %774 = vmatpush.bf16.msra.mxu0 %v684
        %775 = vmatpush.bf16.msra.mxu0 %v682
        %776 = vmatmul.bf16.gmra.mxu0 %v530
        %v777 = vpop.f32.mrf.mxu0
        %v778 = vadd.f32 %v765, %v777
        %v779 = vpop.f32.mrf.mxu0
        %780 = vdwg.mxu0
        %v781 = vmul.f32 %v752, 0.1
        %v782 = vmul.f32 %v778, 0.1
        %v783 = vmax.f32 %v752, %v781
        %v784 = vmax.f32 %v778, %v782
        %v785 = vpack.c.bf16 %v783, %v783
        %v786 = vpack.c.bf16 %v784, %v784
        %v787 = vld [vmem:[#allocation7] sm:$0xf]
        %v788 = vld [vmem:[#allocation7 + $0x4] sm:$0xf]
        %v789 = vld [vmem:[#allocation7 + $0x8] sm:$0xf]
        %v790 = vld [vmem:[#allocation7 + $0xc] sm:$0xf]
        %v791 = vld [vmem:[#allocation7 + $0x10] sm:$0xf]
        %v792 = vld [vmem:[#allocation7 + $0x14] sm:$0xf]
        %v793 = vld [vmem:[#allocation7 + $0x18] sm:$0xf]
        %v794 = vld [vmem:[#allocation7 + $0x1c] sm:$0xf]
        %v795 = vld [vmem:[#allocation7 + $0x20] sm:$0xf]
        %v796 = vld [vmem:[#allocation7 + $0x24] sm:$0xf]
        %v797 = vld [vmem:[#allocation7 + $0x28] sm:$0xf]
        %v798 = vld [vmem:[#allocation7 + $0x2c] sm:$0xf]
        %v799 = vld [vmem:[#allocation7 + $0x30] sm:$0xf]
        %v800 = vld [vmem:[#allocation7 + $0x34] sm:$0xf]
        %v801 = vld [vmem:[#allocation7 + $0x38] sm:$0xf]
        %v802 = vld [vmem:[#allocation7 + $0x3c] sm:$0xf]
        %v803 = vld [vmem:[#allocation7 + $0x40] sm:$0xf]
        %v804 = vld [vmem:[#allocation7 + $0x44] sm:$0xf]
        %v805 = vld [vmem:[#allocation7 + $0x48] sm:$0xf]
        %v806 = vld [vmem:[#allocation7 + $0x4c] sm:$0xf]
        %v807 = vld [vmem:[#allocation7 + $0x50] sm:$0xf]
        %v808 = vld [vmem:[#allocation7 + $0x54] sm:$0xf]
        %v809 = vld [vmem:[#allocation7 + $0x58] sm:$0xf]
        %v810 = vld [vmem:[#allocation7 + $0x5c] sm:$0xf]
        %v811 = vld [vmem:[#allocation7 + $0x60] sm:$0xf]
        %v812 = vld [vmem:[#allocation7 + $0x64] sm:$0xf]
        %v813 = vld [vmem:[#allocation7 + $0x68] sm:$0xf]
        %v814 = vld [vmem:[#allocation7 + $0x6c] sm:$0xf]
        %v815 = vld [vmem:[#allocation7 + $0x70] sm:$0xf]
        %v816 = vld [vmem:[#allocation7 + $0x74] sm:$0xf]
        %v817 = vld [vmem:[#allocation7 + $0x78] sm:$0xf]
        %v818 = vld [vmem:[#allocation7 + $0x7c] sm:$0xf]
        %v819 = vld [vmem:[%s6] sm:$0x1]
        %v821 = vperm.slane %v819, 0
        %v855 = vunpack.c.l.b16 %v787
        %v856 = vunpack.c.l.b16 %v788
        %v857 = vunpack.c.l.b16 %v789
        %v858 = vunpack.c.l.b16 %v790
        %v859 = vunpack.c.l.b16 %v791
        %v860 = vunpack.c.l.b16 %v792
        %v861 = vunpack.c.l.b16 %v793
        %v862 = vunpack.c.l.b16 %v794
        %v863 = vunpack.c.l.b16 %v795
        %v864 = vunpack.c.l.b16 %v796
        %v865 = vunpack.c.l.b16 %v797
        %v866 = vunpack.c.l.b16 %v798
        %v867 = vunpack.c.l.b16 %v799
        %v868 = vunpack.c.l.b16 %v800
        %v869 = vunpack.c.l.b16 %v801
        %v870 = vunpack.c.l.b16 %v802
        %v871 = vunpack.c.l.b16 %v803
        %v872 = vunpack.c.l.b16 %v804
        %v873 = vunpack.c.l.b16 %v805
        %v874 = vunpack.c.l.b16 %v806
        %v875 = vunpack.c.l.b16 %v807
        %v876 = vunpack.c.l.b16 %v808
        %v877 = vunpack.c.l.b16 %v809
        %v878 = vunpack.c.l.b16 %v810
        %v879 = vunpack.c.l.b16 %v811
        %v880 = vunpack.c.l.b16 %v812
        %v881 = vunpack.c.l.b16 %v813
        %v882 = vunpack.c.l.b16 %v814
        %v883 = vunpack.c.l.b16 %v815
        %v884 = vunpack.c.l.b16 %v816
        %v885 = vunpack.c.l.b16 %v817
        %v886 = vunpack.c.l.b16 %v818
        %v887 = vpack.c.b16 %v856, %v855
        %v888 = vpack.c.b16 %v858, %v857
        %v889 = vpack.c.b16 %v860, %v859
        %v890 = vpack.c.b16 %v862, %v861
        %v891 = vpack.c.b16 %v864, %v863
        %v892 = vpack.c.b16 %v866, %v865
        %v893 = vpack.c.b16 %v868, %v867
        %v894 = vpack.c.b16 %v870, %v869
        %v895 = vpack.c.b16 %v872, %v871
        %v896 = vpack.c.b16 %v874, %v873
        %v897 = vpack.c.b16 %v876, %v875
        %v898 = vpack.c.b16 %v878, %v877
        %v899 = vpack.c.b16 %v880, %v879
        %v900 = vpack.c.b16 %v882, %v881
        %v901 = vpack.c.b16 %v884, %v883
        %v902 = vpack.c.b16 %v886, %v885
        %919 = vmatpush.bf16.msra.mxu0 %v894
        %920 = vmatpush.bf16.msra.mxu0 %v893
        %921 = vmatpush.bf16.msra.mxu0 %v892
        %922 = vmatpush.bf16.msra.mxu0 %v891
        %923 = vmatpush.bf16.msra.mxu0 %v890
        %924 = vmatpush.bf16.msra.mxu0 %v889
        %925 = vmatpush.bf16.msra.mxu0 %v888
        %926 = vmatpush.bf16.msra.mxu0 %v887
        %927 = vmatmul.bf16.gmra.mxu0 %v785
        %v928 = vpop.f32.mrf.mxu0
        %v929 = vadd.f32 %v821, %v928
        %v930 = vpop.f32.mrf.mxu0
        %931 = vdwg.mxu0
        %932 = vmatpush.bf16.msra.mxu0 %v902
        %933 = vmatpush.bf16.msra.mxu0 %v901
        %934 = vmatpush.bf16.msra.mxu0 %v900
        %935 = vmatpush.bf16.msra.mxu0 %v899
        %936 = vmatpush.bf16.msra.mxu0 %v898
        %937 = vmatpush.bf16.msra.mxu0 %v897
        %938 = vmatpush.bf16.msra.mxu0 %v896
        %939 = vmatpush.bf16.msra.mxu0 %v895
        %940 = vmatmul.bf16.gmra.mxu0 %v786
        %v941 = vpop.f32.mrf.mxu0
        %v942 = vadd.f32 %v929, %v941
        %v943 = vpop.f32.mrf.mxu0
        %944 = vdwg.mxu0
        %v945 = vmul.f32 %v942, 0.1
        %v946 = vmax.f32 %v942, %v945
        %v947 = vpack.c.bf16 %v946, %v946
        %v948 = vld [vmem:[#allocation8] sm:$0xf]
        %v949 = vld [vmem:[#allocation8 + $0x4] sm:$0xf]
        %v950 = vld [vmem:[#allocation8 + $0x8] sm:$0xf]
        %v951 = vld [vmem:[#allocation8 + $0xc] sm:$0xf]
        %v952 = vld [vmem:[#allocation8 + $0x10] sm:$0xf]
        %v953 = vld [vmem:[#allocation8 + $0x14] sm:$0xf]
        %v954 = vld [vmem:[#allocation8 + $0x18] sm:$0xf]
        %v955 = vld [vmem:[#allocation8 + $0x1c] sm:$0xf]
        %v956 = vld [vmem:[#allocation8 + $0x20] sm:$0xf]
        %v957 = vld [vmem:[#allocation8 + $0x24] sm:$0xf]
        %v958 = vld [vmem:[#allocation8 + $0x28] sm:$0xf]
        %v959 = vld [vmem:[#allocation8 + $0x2c] sm:$0xf]
        %v960 = vld [vmem:[#allocation8 + $0x30] sm:$0xf]
        %v961 = vld [vmem:[#allocation8 + $0x34] sm:$0xf]
        %v962 = vld [vmem:[#allocation8 + $0x38] sm:$0xf]
        %v963 = vld [vmem:[#allocation8 + $0x3c] sm:$0xf]
        %v964 = vld [vmem:[%s8] sm:$0x1]
        %v966 = vperm.slane %v964, 0
        %v984 = vunpack.c.l.b16 %v948
        %v985 = vunpack.c.l.b16 %v949
        %v986 = vunpack.c.l.b16 %v950
        %v987 = vunpack.c.l.b16 %v951
        %v988 = vunpack.c.l.b16 %v952
        %v989 = vunpack.c.l.b16 %v953
        %v990 = vunpack.c.l.b16 %v954
        %v991 = vunpack.c.l.b16 %v955
        %v992 = vunpack.c.l.b16 %v956
        %v993 = vunpack.c.l.b16 %v957
        %v994 = vunpack.c.l.b16 %v958
        %v995 = vunpack.c.l.b16 %v959
        %v996 = vunpack.c.l.b16 %v960
        %v997 = vunpack.c.l.b16 %v961
        %v998 = vunpack.c.l.b16 %v962
        %v999 = vunpack.c.l.b16 %v963
        %v1000 = vpack.c.b16 %v985, %v984
        %v1001 = vpack.c.b16 %v987, %v986
        %v1002 = vpack.c.b16 %v989, %v988
        %v1003 = vpack.c.b16 %v991, %v990
        %v1004 = vpack.c.b16 %v993, %v992
        %v1005 = vpack.c.b16 %v995, %v994
        %v1006 = vpack.c.b16 %v997, %v996
        %v1007 = vpack.c.b16 %v999, %v998
        %1016 = vmatpush.bf16.msra.mxu0 %v1007
        %1017 = vmatpush.bf16.msra.mxu0 %v1006
        %1018 = vmatpush.bf16.msra.mxu0 %v1005
        %1019 = vmatpush.bf16.msra.mxu0 %v1004
        %1020 = vmatpush.bf16.msra.mxu0 %v1003
        %1021 = vmatpush.bf16.msra.mxu0 %v1002
        %1022 = vmatpush.bf16.msra.mxu0 %v1001
        %1023 = vmatpush.bf16.msra.mxu0 %v1000
        %1024 = vmatmul.bf16.gmra.mxu0 %v947
        %v1025 = vpop.f32.mrf.mxu0
        %v1026 = vadd.f32 %v966, %v1025
        %v1027 = vpop.f32.mrf.mxu0
        %1028 = vdwg.mxu0
        %v1029 = vmul.f32 %v1026, %v1026
        %1030 = vadd.xlane.f32.xlu0 %v1029
        %v1031 = vpop.xlane.xlu0 %1030
        %v1032 = vmax.f32 %v1031, 1e-24
        %v1033 = vrsqrt.pop %v1032
        %v1034 = vmul.f32 %v1033, %v1032
        %v1035 = vmul.f32 %v1034, %v1033
        %v1036 = vmul.f32 0.5, %v1035
        %v1037 = vsub.f32 1.5, %v1036
        %v1038 = vmul.f32 %v1033, %v1037
        %vm1039 = vweird.f32 %v1032
        %vm1040 = vweird.f32 %v1033
        %vm1041 = vmor %vm1039, %vm1040
        %v1042 = vsel %vm1041, %v1033, %v1038
        %v1043 = vmul.f32 %v1026, %v1042
        %1044 = vst [vmem:[%s390] sm:$0xff] %v1043
        %s1045 = sand.u32 %s228, 1
        %s1046 = scalar_lea.sflag [#allocation4], %s1045
        %s1047 = sand.u32 %s228, 1
        %s1048 = smul.addr %s1047, 8
        %s1049 = scalar_lea.vmem [#allocation10], %s1048
        // Predicated region
        $region73: #{enhanced_encoder.1} parent=55 // pred_check
          %p1050 = pneg %p238
        $region74: #{enhanced_encoder.1} parent=55 // pred_check_branch
          %1052 = sbr.rel (%p1050) target = $region76
        $region75: #{enhanced_encoder.1} parent=55 // pred_region
          %1054 = vsyncadd %s1046, 0
          %s1055 = smul.addr %s26, 8
          %s1056 = scalar_lea.hbm %s9, %s1055
          %s1058 = sshll.u32 %s1049, 4
          %s1059 = int_to_ptr.vmem [resolvable:$true] %s1058
          %s1060 = sshll.u32 %s1056, 4
          %s1061 = int_to_ptr.hbm [resolvable:$true] %s1060
          %1063 = dma.vmem_to_hbm [thread:$0]  %s1059, 128, %s1061, %s1046
        $region76: #{enhanced_encoder.1} parent=55 // pred_fallthru
          _
      $region56: #{enhanced_encoder.1} parent=5 // pred_fallthru
        _
      %p1064 = scmp.le.s32.totalorder 2, %s21
      // Predicated region
      $region77: #{enhanced_encoder.1} parent=5 // pred_check
        %p1065 = pneg %p1064
      $region78: #{enhanced_encoder.1} parent=5 // pred_check_branch
        %1067 = sbr.rel (%p1065) target = $region80
      $region79: #{enhanced_encoder.1} parent=5 // pred_region
        %s1068 = ssub.s32 %s21, 2
        // Predicated region
        $region81: #{enhanced_encoder.1} parent=79 // pred_check
          %p1069 = pneg %p244
        $region82: #{enhanced_encoder.1} parent=79 // pred_check_branch
          %1071 = sbr.rel (%p1069) target = $region84
        $region83: #{enhanced_encoder.1} parent=79 // pred_region
          %s1072 = sand.u32 %s229, 1
          %s1073 = scalar_lea.sflag [#allocation4], %s1072
          %s1074 = sand.u32 %s229, 1
          %s1075 = smul.addr %s1074, 8
          %s1076 = scalar_lea.vmem [#allocation10], %s1075
          %1078 = dma.done %s1073, 128
        $region84: #{enhanced_encoder.1} parent=79 // pred_fallthru
          _
      $region80: #{enhanced_encoder.1} parent=5 // pred_fallthru
        _
    $region6: #{enhanced_encoder.1} parent=1 // loop_footer
      %s25 = sadd.s32 1, %s21
    $region7: #{enhanced_encoder.1} parent=1 // loop_footer_branch
      %20 = sbr.rel target = $region3
    $region8: #{enhanced_encoder.1} parent=1 // loop_exit
      _
    %1079 = vsyncpa [#allocation3], 1
    %s1080 = scalar_lea.sflag [#allocation3], 1
    %1081 = vsyncpa %s1080, 1
    %1082 = vsyncpa [#allocation6], 1
    %1083 = vsyncpa [#allocation9], 1
    %1084 = vsyncpa [#allocation4], 1
    %s1085 = scalar_lea.sflag [#allocation4], 1
    %1086 = vsyncpa %s1085, 1

</llo_original>
